<compile_context>
chip_gen: v5e
topology: v5e:2x2
jax: 0.10.0
libtpu: 0.0.40
codegen_flags: <defaults>
</compile_context>

<pallas_src>
import functools

import jax
import jax.numpy as jnp
from jax.experimental import pallas as pl
from jax.experimental.pallas import tpu as pltpu

FEATURES = 32  # `features` module-level constant in the PyTorch source


def _round_up(n, m):
    return ((n + m - 1) // m) * m


def _cdiv(a, b):
    return (a + b - 1) // b


def vae_kernel(xe_ref,
               w1_ref, b1_ref, w2_ref, b2_ref,
               w3_ref, b3_ref, w4_ref, b4_ref,
               out_ref, *, d_in):
    # Packed lane-dense input tile: [x(d_in) | eps(FEATURES) | zero pad] -> pack_w lanes.
    xe = xe_ref[...]

    # ----- encoder (W1 is zero-padded to pack_w rows, so eps/pad lanes contribute 0) -----
    h = jnp.dot(xe, w1_ref[...], preferred_element_type=jnp.float32) + b1_ref[...]
    h = jnp.maximum(h, 0.0)

    # Single merged encoder-head dot: mu_lv = [mu | log_var], width 2*FEATURES.
    mu_lv = jnp.dot(h, w2_ref[...], preferred_element_type=jnp.float32) + b2_ref[...]
    mu = mu_lv[:, :FEATURES]
    log_var = mu_lv[:, FEATURES:]

    # ----- reparametrize (training mode: mu + eps * std) -----
    eps = xe[:, d_in:d_in + FEATURES]            # static lane slice of the packed input
    z = mu + eps * jnp.exp(0.5 * log_var)        # exp rides the EUP slot

    # ----- decoder -----
    h2 = jnp.dot(z, w3_ref[...], preferred_element_type=jnp.float32) + b3_ref[...]
    h2 = jnp.maximum(h2, 0.0)
    recon = jnp.tanh(jnp.dot(h2, w4_ref[...], preferred_element_type=jnp.float32) + b4_ref[...])

    # Single lane-dense output stream: [recon | mu | log_var] (no dead lanes for d_in=64).
    parts = [recon, mu_lv]
    pad = out_ref.shape[-1] - (recon.shape[-1] + mu_lv.shape[-1])
    if pad:  # only for d_in where d_in + 2*FEATURES is not a multiple of 128
        parts.append(jnp.zeros((recon.shape[0], pad), jnp.float32))
    out_ref[...] = jnp.concatenate(parts, axis=-1)


def vae_forward(x, eps, params, *, block_b=4096, min_grid_steps=1,
                vmem_limit_bytes=32 * 1024 * 1024):
    """VAE forward in one Pallas kernel: batch-tiled grid, resident weights.

    block_b:        max rows per grid step (thousands amortize the ~0.35us/step overhead).
    min_grid_steps: set to 2 on v7x so the "parallel" batch axis spans both TensorCores;
                    leave at 1 on v5e/v6e (single TC), where one biggest tile is best.
    vmem_limit_bytes: 32 MiB is safe on v7x (64 MiB physical); v5e/v6e (128 MiB) may raise.
    """
    w1, b1, w2, b2, w3, b3, w4, b4 = params
    B, d_in = x.shape
    mid = w1.shape[1]

    pack_w = _round_up(d_in + FEATURES, 128)          # packed input width  [x | eps | pad]
    out_w = _round_up(d_in + 2 * FEATURES, 128)       # packed output width [recon | mu | log_var]

    # ----- tile / grid selection: fewest steps, minimal padding, 8-aligned tiles -----
    block_b = max(8, (block_b // 8) * 8)              # round DOWN to a sublane multiple
    steps = max(int(min_grid_steps), _cdiv(_round_up(B, 8), block_b))
    if min_grid_steps > 1:
        steps = _round_up(steps, min_grid_steps)      # even split across TCs on v7x
    tb = _round_up(_cdiv(B, steps), 8)
    B_pad = steps * tb

    # ----- pack inputs into one lane-dense stream; zero-pad W1's K dim to match -----
    xe = jnp.zeros((B_pad, pack_w), jnp.float32)
    xe = xe.at[:B, :d_in].set(x)
    xe = xe.at[:B, d_in:d_in + FEATURES].set(eps)
    w1p = jnp.zeros((pack_w, mid), jnp.float32).at[:d_in].set(w1)

    def tiled(shape):      # batch-tiled
        return pl.BlockSpec(shape, lambda i: (i, 0))

    def resident(shape):   # constant index_map -> stays in VMEM, DMA'd once
        return pl.BlockSpec(shape, lambda i: (0, 0))

    in_specs = [
        tiled((tb, pack_w)),              # packed [x | eps | pad]
        resident((pack_w, mid)),          # W1 (zero-padded rows)
        resident((1, mid)),               # b1
        resident((mid, 2 * FEATURES)),    # W2 (merged mu|log_var columns)
        resident((1, 2 * FEATURES)),      # b2
        resident((FEATURES, mid)),        # W3
        resident((1, mid)),               # b3
        resident((mid, d_in)),            # W4
        resident((1, d_in)),              # b4
    ]
    out_specs = tiled((tb, out_w))
    out_shape = jax.ShapeDtypeStruct((B_pad, out_w), jnp.float32)

    weight_elems = pack_w * mid + mid * 2 * FEATURES + FEATURES * mid + mid * d_in
    cost = pl.CostEstimate(
        flops=2 * B_pad * weight_elems,
        transcendentals=B_pad * (FEATURES + d_in),        # exp per latent + tanh per output
        bytes_accessed=4 * (B_pad * (pack_w + out_w)      # packed input + packed output
                            + weight_elems                # weights
                            + 2 * mid + 2 * FEATURES + d_in),  # biases
    )

    out = pl.pallas_call(
        functools.partial(vae_kernel, d_in=d_in),
        out_shape=out_shape,
        grid=(steps,),
        in_specs=in_specs,
        out_specs=out_specs,
        compiler_params=pltpu.CompilerParams(
            dimension_semantics=("parallel",),            # shard batch tiles across TCs on v7x
            vmem_limit_bytes=vmem_limit_bytes,
        ),
        cost_estimate=cost,
    )(xe, w1p, b1, w2, b2, w3, b3, w4, b4)

    recon = out[:B, :d_in]
    mu = out[:B, d_in:d_in + FEATURES]
    log_var = out[:B, d_in + FEATURES:d_in + 2 * FEATURES]
    # Recompute z in the wrapper (fuses into the slicing pass; saves 128 B/row of writeback).
    z = mu + eps * jnp.exp(0.5 * log_var)
    return recon, mu, log_var, z


def init_params(key, input_shape, mid_dim):
    """Deterministic synthetic parameters (shapes match nn.Linear layers, stored (in, out))."""
    ks = jax.random.split(key, 8)

    def lin(k_w, k_b, fan_in, fan_out):
        bound = 1.0 / jnp.sqrt(fan_in)
        w = jax.random.uniform(k_w, (fan_in, fan_out), jnp.float32, -bound, bound)
        b = jax.random.uniform(k_b, (1, fan_out), jnp.float32, -bound, bound)
        return w, b

    w1, b1 = lin(ks[0], ks[1], input_shape, mid_dim)      # encoder[0]
    w2, b2 = lin(ks[2], ks[3], mid_dim, FEATURES * 2)     # encoder[2]
    w3, b3 = lin(ks[4], ks[5], FEATURES, mid_dim)         # decoder[0]
    w4, b4 = lin(ks[6], ks[7], mid_dim, input_shape)      # decoder[2]
    return (w1, b1, w2, b2, w3, b3, w4, b4)


def vae_reference(x, eps, params):
    """Pure-JAX f32 reference matching the PyTorch forward (training mode)."""
    w1, b1, w2, b2, w3, b3, w4, b4 = params
    h = jnp.maximum(jnp.dot(x, w1) + b1, 0.0)
    mu_lv = jnp.dot(h, w2) + b2
    mu, log_var = mu_lv[:, :FEATURES], mu_lv[:, FEATURES:]
    z = mu + eps * jnp.exp(0.5 * log_var)
    h2 = jnp.maximum(jnp.dot(z, w3) + b3, 0.0)
    recon = jnp.tanh(jnp.dot(h2, w4) + b4)
    return recon, mu, log_var, z


if __name__ == "__main__":
    B, INPUT_SHAPE, MID_DIM = 256, 64, 128   # small; defaults give a single grid step

    key = jax.random.PRNGKey(0)
    k_x, k_eps, k_p = jax.random.split(key, 3)

    x = jax.random.normal(k_x, (B, INPUT_SHAPE), jnp.float32)
    # TODO(synk): torch.randn_like inside reparametrize has no in-kernel equivalent we want
    # to replicate bit-for-bit; eps is generated here (training-mode noise) and passed in.
    eps = jax.random.normal(k_eps, (B, FEATURES), jnp.float32)
    params = init_params(k_p, INPUT_SHAPE, MID_DIM)

    outs = jax.block_until_ready(vae_forward(x, eps, params))
    refs = vae_reference(x, eps, params)
    for o, r in zip(outs, refs):
        assert o.shape == r.shape and o.dtype == r.dtype
        assert jnp.allclose(o, r, atol=1e-5, rtol=1e-5), float(jnp.max(jnp.abs(o - r)))

    print("KERNEL_OK")
</pallas_src>

<mosaic_0001>
module attributes {stable_mosaic.version = 11 : i64} {
  func.func @vae_kernel(%arg0: i32, %arg1: memref<256x128xf32, #tpu.memory_space<vmem>>, %arg2: memref<128x128xf32, #tpu.memory_space<vmem>>, %arg3: memref<1x128xf32, #tpu.memory_space<vmem>>, %arg4: memref<128x64xf32, #tpu.memory_space<vmem>>, %arg5: memref<1x64xf32, #tpu.memory_space<vmem>>, %arg6: memref<32x128xf32, #tpu.memory_space<vmem>>, %arg7: memref<1x128xf32, #tpu.memory_space<vmem>>, %arg8: memref<128x64xf32, #tpu.memory_space<vmem>>, %arg9: memref<1x64xf32, #tpu.memory_space<vmem>>, %arg10: memref<256x128xf32, #tpu.memory_space<vmem>>) attributes {dimension_semantics = [#tpu.dimension_semantics<parallel>], iteration_bounds = array<i64: 1>, scalar_prefetch = 0 : i64, scratch_operands = 0 : i64, tpu.core_type = #tpu.core_type<tc>, window_params = [{transform_indices = @transform_0, window_bounds = array<i64: 256, 128>}, {pipeline_mode = #tpu.pipeline_mode<synchronous>, transform_indices = @transform_1, window_bounds = array<i64: 128, 128>}, {pipeline_mode = #tpu.pipeline_mode<synchronous>, transform_indices = @transform_2, window_bounds = array<i64: 1, 128>}, {pipeline_mode = #tpu.pipeline_mode<synchronous>, transform_indices = @transform_3, window_bounds = array<i64: 128, 64>}, {pipeline_mode = #tpu.pipeline_mode<synchronous>, transform_indices = @transform_4, window_bounds = array<i64: 1, 64>}, {pipeline_mode = #tpu.pipeline_mode<synchronous>, transform_indices = @transform_5, window_bounds = array<i64: 32, 128>}, {pipeline_mode = #tpu.pipeline_mode<synchronous>, transform_indices = @transform_6, window_bounds = array<i64: 1, 128>}, {pipeline_mode = #tpu.pipeline_mode<synchronous>, transform_indices = @transform_7, window_bounds = array<i64: 128, 64>}, {pipeline_mode = #tpu.pipeline_mode<synchronous>, transform_indices = @transform_8, window_bounds = array<i64: 1, 64>}, {transform_indices = @transform_9, window_bounds = array<i64: 256, 128>}]} {
    %c0 = arith.constant 0 : index
    %c0_0 = arith.constant 0 : index
    %0 = vector.load %arg1[%c0, %c0_0] : memref<256x128xf32, #tpu.memory_space<vmem>>, vector<256x128xf32>
    %c0_1 = arith.constant 0 : index
    %c0_2 = arith.constant 0 : index
    %1 = vector.load %arg2[%c0_1, %c0_2] : memref<128x128xf32, #tpu.memory_space<vmem>>, vector<128x128xf32>
    %cst = arith.constant dense<0.000000e+00> : vector<256x128xf32>
    %2 = tpu.matmul %0, %1, %cst {dimension_numbers = #tpu.dot_dimension_numbers<[1], [0], [0], [1], [0, 0, 1, 1], [], []>} : vector<256x128xf32>, vector<128x128xf32>, vector<256x128xf32> -> vector<256x128xf32>
    %c0_3 = arith.constant 0 : index
    %c0_4 = arith.constant 0 : index
    %3 = vector.load %arg3[%c0_3, %c0_4] : memref<1x128xf32, #tpu.memory_space<vmem>>, vector<1x128xf32>
    %4 = vector.broadcast %3 : vector<1x128xf32> to vector<256x128xf32>
    %5 = arith.addf %2, %4 : vector<256x128xf32>
    %cst_5 = arith.constant 0.000000e+00 : f32
    %6 = vector.broadcast %cst_5 : f32 to vector<256x128xf32>
    %7 = arith.maximumf %5, %6 : vector<256x128xf32>
    %c0_6 = arith.constant 0 : index
    %c0_7 = arith.constant 0 : index
    %8 = vector.load %arg4[%c0_6, %c0_7] : memref<128x64xf32, #tpu.memory_space<vmem>>, vector<128x64xf32>
    %cst_8 = arith.constant dense<0.000000e+00> : vector<256x64xf32>
    %9 = tpu.matmul %7, %8, %cst_8 {dimension_numbers = #tpu.dot_dimension_numbers<[1], [0], [0], [1], [0, 0, 1, 1], [], []>} : vector<256x128xf32>, vector<128x64xf32>, vector<256x64xf32> -> vector<256x64xf32>
    %c0_9 = arith.constant 0 : index
    %c0_10 = arith.constant 0 : index
    %10 = vector.load %arg5[%c0_9, %c0_10] : memref<1x64xf32, #tpu.memory_space<vmem>>, vector<1x64xf32>
    %11 = vector.broadcast %10 : vector<1x64xf32> to vector<256x64xf32>
    %12 = arith.addf %9, %11 : vector<256x64xf32>
    %13 = vector.extract_strided_slice %12 {offsets = [0, 0], sizes = [256, 32], strides = [1, 1]} : vector<256x64xf32> to vector<256x32xf32>
    %14 = vector.extract_strided_slice %12 {offsets = [0, 32], sizes = [256, 32], strides = [1, 1]} : vector<256x64xf32> to vector<256x32xf32>
    %15 = vector.extract_strided_slice %0 {offsets = [0, 64], sizes = [256, 32], strides = [1, 1]} : vector<256x128xf32> to vector<256x32xf32>
    %cst_11 = arith.constant 5.000000e-01 : f32
    %16 = vector.broadcast %cst_11 : f32 to vector<256x32xf32>
    %17 = arith.mulf %16, %14 : vector<256x32xf32>
    %18 = math.exp %17 : vector<256x32xf32>
    %19 = arith.mulf %15, %18 : vector<256x32xf32>
    %20 = arith.addf %13, %19 : vector<256x32xf32>
    %c0_12 = arith.constant 0 : index
    %c0_13 = arith.constant 0 : index
    %21 = vector.load %arg6[%c0_12, %c0_13] : memref<32x128xf32, #tpu.memory_space<vmem>>, vector<32x128xf32>
    %cst_14 = arith.constant dense<0.000000e+00> : vector<256x128xf32>
    %22 = tpu.matmul %20, %21, %cst_14 {dimension_numbers = #tpu.dot_dimension_numbers<[1], [0], [0], [1], [0, 0, 1, 1], [], []>} : vector<256x32xf32>, vector<32x128xf32>, vector<256x128xf32> -> vector<256x128xf32>
    %c0_15 = arith.constant 0 : index
    %c0_16 = arith.constant 0 : index
    %23 = vector.load %arg7[%c0_15, %c0_16] : memref<1x128xf32, #tpu.memory_space<vmem>>, vector<1x128xf32>
    %24 = vector.broadcast %23 : vector<1x128xf32> to vector<256x128xf32>
    %25 = arith.addf %22, %24 : vector<256x128xf32>
    %cst_17 = arith.constant 0.000000e+00 : f32
    %26 = vector.broadcast %cst_17 : f32 to vector<256x128xf32>
    %27 = arith.maximumf %25, %26 : vector<256x128xf32>
    %c0_18 = arith.constant 0 : index
    %c0_19 = arith.constant 0 : index
    %28 = vector.load %arg8[%c0_18, %c0_19] : memref<128x64xf32, #tpu.memory_space<vmem>>, vector<128x64xf32>
    %cst_20 = arith.constant dense<0.000000e+00> : vector<256x64xf32>
    %29 = tpu.matmul %27, %28, %cst_20 {dimension_numbers = #tpu.dot_dimension_numbers<[1], [0], [0], [1], [0, 0, 1, 1], [], []>} : vector<256x128xf32>, vector<128x64xf32>, vector<256x64xf32> -> vector<256x64xf32>
    %c0_21 = arith.constant 0 : index
    %c0_22 = arith.constant 0 : index
    %30 = vector.load %arg9[%c0_21, %c0_22] : memref<1x64xf32, #tpu.memory_space<vmem>>, vector<1x64xf32>
    %31 = vector.broadcast %30 : vector<1x64xf32> to vector<256x64xf32>
    %32 = arith.addf %29, %31 : vector<256x64xf32>
    %33 = math.tanh %32 : vector<256x64xf32>
    %34 = tpu.concatenate %33, %12 in 1 : vector<256x64xf32>, vector<256x64xf32> -> vector<256x128xf32>
    %c0_23 = arith.constant 0 : index
    %c0_24 = arith.constant 0 : index
    %35 = vector.load %arg10[%c0_23, %c0_24] : memref<256x128xf32, #tpu.memory_space<vmem>>, vector<256x128xf32>
    tpu.vector_store %arg10[%c0_23, %c0_24], %34 {strides = array<i32>} : memref<256x128xf32, #tpu.memory_space<vmem>>, vector<256x128xf32>,
    return
  }
  func.func @transform_0(%arg0: i32) -> (i32, i32) {
    %c0_i32 = arith.constant 0 : i32
    %c0_i32_0 = arith.constant 0 : i32
    return %arg0, %c0_i32 : i32, i32
  }
  func.func @transform_1(%arg0: i32) -> (i32, i32) {
    %c0_i32 = arith.constant 0 : i32
    %c0_i32_0 = arith.constant 0 : i32
    %c0_i32_1 = arith.constant 0 : i32
    return %c0_i32, %c0_i32_0 : i32, i32
  }
  func.func @transform_2(%arg0: i32) -> (i32, i32) {
    %c0_i32 = arith.constant 0 : i32
    %c0_i32_0 = arith.constant 0 : i32
    %c0_i32_1 = arith.constant 0 : i32
    return %c0_i32, %c0_i32_0 : i32, i32
  }
  func.func @transform_3(%arg0: i32) -> (i32, i32) {
    %c0_i32 = arith.constant 0 : i32
    %c0_i32_0 = arith.constant 0 : i32
    %c0_i32_1 = arith.constant 0 : i32
    return %c0_i32, %c0_i32_0 : i32, i32
  }
  func.func @transform_4(%arg0: i32) -> (i32, i32) {
    %c0_i32 = arith.constant 0 : i32
    %c0_i32_0 = arith.constant 0 : i32
    %c0_i32_1 = arith.constant 0 : i32
    return %c0_i32, %c0_i32_0 : i32, i32
  }
  func.func @transform_5(%arg0: i32) -> (i32, i32) {
    %c0_i32 = arith.constant 0 : i32
    %c0_i32_0 = arith.constant 0 : i32
    %c0_i32_1 = arith.constant 0 : i32
    return %c0_i32, %c0_i32_0 : i32, i32
  }
  func.func @transform_6(%arg0: i32) -> (i32, i32) {
    %c0_i32 = arith.constant 0 : i32
    %c0_i32_0 = arith.constant 0 : i32
    %c0_i32_1 = arith.constant 0 : i32
    return %c0_i32, %c0_i32_0 : i32, i32
  }
  func.func @transform_7(%arg0: i32) -> (i32, i32) {
    %c0_i32 = arith.constant 0 : i32
    %c0_i32_0 = arith.constant 0 : i32
    %c0_i32_1 = arith.constant 0 : i32
    return %c0_i32, %c0_i32_0 : i32, i32
  }
  func.func @transform_8(%arg0: i32) -> (i32, i32) {
    %c0_i32 = arith.constant 0 : i32
    %c0_i32_0 = arith.constant 0 : i32
    %c0_i32_1 = arith.constant 0 : i32
    return %c0_i32, %c0_i32_0 : i32, i32
  }
  func.func @transform_9(%arg0: i32) -> (i32, i32) {
    %c0_i32 = arith.constant 0 : i32
    %c0_i32_0 = arith.constant 0 : i32
    return %arg0, %c0_i32 : i32, i32
  }
}

</mosaic_0001>

<llo_original>
// kernel: tpu_custom_call.1
$region0: #{tpu_custom_call.1}
  #allocation0 [shape = 'u32[]', space=smem, size = 0x4, offset = 0x4, fixed_abs, tag = 'smem constant byte address 0x4 - core index']
  #allocation1 [shape = 'u32[72,128]{1,0:T(1,128)}', space=vmem, size = 0x9000, scoped, tag = 'internal scratch']
  %s0 = inlined_call_operand.vmem [shape: f32[256,128], index: 0, kind: input, shape index: {}]
  %s1 = inlined_call_operand.vmem [shape: f32[128,128], index: 1, kind: input, shape index: {}]
  %s2 = inlined_call_operand.hbm [shape: f32[1,128], index: 2, kind: input, shape index: {}]
  %s3 = inlined_call_operand.vmem [shape: f32[128,64], index: 3, kind: input, shape index: {}]
  %s4 = inlined_call_operand.hbm [shape: f32[1,64], index: 4, kind: input, shape index: {}]
  %s5 = inlined_call_operand.hbm [shape: f32[32,128], index: 5, kind: input, shape index: {}]
  %s6 = inlined_call_operand.vmem [shape: f32[1,128], index: 6, kind: input, shape index: {}]
  %s7 = inlined_call_operand.vmem [shape: f32[128,64], index: 7, kind: input, shape index: {}]
  %s8 = inlined_call_operand.vmem [shape: f32[1,64], index: 8, kind: input, shape index: {}]
  %s9 = inlined_call_operand.hbm [shape: f32[256,128], index: 9, kind: output, shape index: {}]
  %s10 = sld [smem:[#allocation0]]
  $region58: #{tpu_custom_call.1} parent=0
    _
  %s12 = ssub.s32 1, %s10
  %s13 = scalar_select 0, %s12, %s10
  $region1: #{tpu_custom_call.1} parent=0
    #allocation2 [shape = 'u8[512]{0}', space=vmem, size = 0x400, scoped, tag = 'input window, operand 2, single buffered']
    #allocation3 [shape = 's32[1]{0}', space=sflag, size = 0x4, scoped, tag = 'scoped memory for tpu_custom_call.1']
    #allocation4 [shape = 's32[1]{0}', space=sflag, size = 0x4, scoped, tag = 'scoped memory for tpu_custom_call.1']
    #allocation5 [shape = 'u8[512]{0}', space=vmem, size = 0x400, scoped, tag = 'input window, operand 4, single buffered']
    #allocation6 [shape = 's32[1]{0}', space=sflag, size = 0x4, scoped, tag = 'scoped memory for tpu_custom_call.1']
    #allocation7 [shape = 'u8[16384]{0}', space=vmem, size = 0x4000, scoped, tag = 'input window, operand 5, single buffered']
    #allocation8 [shape = 'u8[131072]{0}', space=vmem, size = 0x20000, scoped, tag = 'output window, operand 0, single buffered']
    %14 = vsyncpa [#allocation3], 0
    %15 = vsyncpa [#allocation6], 0
    %16 = vsyncpa [#allocation4], 0
    // Predicated region
    $region2: #{tpu_custom_call.1} parent=1 // pred_check
      _
    $region3: #{tpu_custom_call.1} parent=1 // pred_check_branch
      %18 = sbr.rel (0) target = $region5
    $region4: #{tpu_custom_call.1} parent=1 // pred_region
      _
    $region5: #{tpu_custom_call.1} parent=1 // pred_fallthru
      _
    // Predicated region
    $region6: #{tpu_custom_call.1} parent=1 // pred_check
      _
    $region7: #{tpu_custom_call.1} parent=1 // pred_check_branch
      %20 = sbr.rel (0) target = $region9
    $region8: #{tpu_custom_call.1} parent=1 // pred_region
      _
    $region9: #{tpu_custom_call.1} parent=1 // pred_fallthru
      _
    // Predicated region
    $region10: #{tpu_custom_call.1} parent=1 // pred_check
      _
    $region11: #{tpu_custom_call.1} parent=1 // pred_check_branch
      %22 = sbr.rel (0) target = $region13
    $region12: #{tpu_custom_call.1} parent=1 // pred_region
      %24 = vsyncadd [#allocation3], 0
      %s26 = sshll.u32 %s2, 4
      %s27 = int_to_ptr.hbm [resolvable:$true] %s26
      %s28 = sshll.u32 [#allocation2], 4
      %s29 = int_to_ptr.vmem [resolvable:$true] %s28
      %31 = dma.hbm_to_vmem [thread:$0]  %s27, 16, %s29, [#allocation3]
    $region13: #{tpu_custom_call.1} parent=1 // pred_fallthru
      _
    // Predicated region
    $region14: #{tpu_custom_call.1} parent=1 // pred_check
      _
    $region15: #{tpu_custom_call.1} parent=1 // pred_check_branch
      %33 = sbr.rel (0) target = $region17
    $region16: #{tpu_custom_call.1} parent=1 // pred_region
      _
    $region17: #{tpu_custom_call.1} parent=1 // pred_fallthru
      _
    // Predicated region
    $region18: #{tpu_custom_call.1} parent=1 // pred_check
      _
    $region19: #{tpu_custom_call.1} parent=1 // pred_check_branch
      %35 = sbr.rel (0) target = $region21
    $region20: #{tpu_custom_call.1} parent=1 // pred_region
      %37 = vsyncadd [#allocation6], 0
      %s39 = sshll.u32 %s4, 4
      %s40 = int_to_ptr.hbm [resolvable:$true] %s39
      %s41 = sshll.u32 [#allocation5], 4
      %s42 = int_to_ptr.vmem [resolvable:$true] %s41
      %44 = dma.hbm_to_vmem [thread:$0]  %s40, 16, %s42, [#allocation6]
    $region21: #{tpu_custom_call.1} parent=1 // pred_fallthru
      _
    // Predicated region
    $region22: #{tpu_custom_call.1} parent=1 // pred_check
      _
    $region23: #{tpu_custom_call.1} parent=1 // pred_check_branch
      %46 = sbr.rel (0) target = $region25
    $region24: #{tpu_custom_call.1} parent=1 // pred_region
      %48 = vsyncadd [#allocation6], 0
      %s49 = sshll.u32 %s5, 4
      %s50 = int_to_ptr.hbm [resolvable:$true] %s49
      %s51 = sshll.u32 [#allocation7], 4
      %s52 = int_to_ptr.vmem [resolvable:$true] %s51
      %57 = dma.hbm_to_vmem [thread:$0]  %s50, 512, %s52, [#allocation6], 128, 128, 8
    $region25: #{tpu_custom_call.1} parent=1 // pred_fallthru
      _
    // Predicated region
    $region26: #{tpu_custom_call.1} parent=1 // pred_check
      _
    $region27: #{tpu_custom_call.1} parent=1 // pred_check_branch
      %59 = sbr.rel (0) target = $region29
    $region28: #{tpu_custom_call.1} parent=1 // pred_region
      _
    $region29: #{tpu_custom_call.1} parent=1 // pred_fallthru
      _
    // Predicated region
    $region30: #{tpu_custom_call.1} parent=1 // pred_check
      _
    $region31: #{tpu_custom_call.1} parent=1 // pred_check_branch
      %61 = sbr.rel (0) target = $region33
    $region32: #{tpu_custom_call.1} parent=1 // pred_region
      _
    $region33: #{tpu_custom_call.1} parent=1 // pred_fallthru
      _
    // Predicated region
    $region34: #{tpu_custom_call.1} parent=1 // pred_check
      _
    $region35: #{tpu_custom_call.1} parent=1 // pred_check_branch
      %63 = sbr.rel (0) target = $region37
    $region36: #{tpu_custom_call.1} parent=1 // pred_region
      _
    $region37: #{tpu_custom_call.1} parent=1 // pred_fallthru
      _
    // Predicated region
    $region38: #{tpu_custom_call.1} parent=1 // pred_check
      _
    $region39: #{tpu_custom_call.1} parent=1 // pred_check_branch
      %65 = sbr.rel (0) target = $region41
    $region40: #{tpu_custom_call.1} parent=1 // pred_region
      %67 = dma.done [#allocation3], 16
    $region41: #{tpu_custom_call.1} parent=1 // pred_fallthru
      _
    // Predicated region
    $region42: #{tpu_custom_call.1} parent=1 // pred_check
      _
    $region43: #{tpu_custom_call.1} parent=1 // pred_check_branch
      %69 = sbr.rel (0) target = $region45
    $region44: #{tpu_custom_call.1} parent=1 // pred_region
      %71 = dma.done [#allocation6], 16
    $region45: #{tpu_custom_call.1} parent=1 // pred_fallthru
      _
    // Predicated region
    $region46: #{tpu_custom_call.1} parent=1 // pred_check
      _
    $region47: #{tpu_custom_call.1} parent=1 // pred_check_branch
      %73 = sbr.rel (0) target = $region49
    $region48: #{tpu_custom_call.1} parent=1 // pred_region
      %75 = dma.done [#allocation6], 512
    $region49: #{tpu_custom_call.1} parent=1 // pred_fallthru
      _
    %v76 = vld [vmem:[%s0] sm:$0xff]
    %v77 = vld [vmem:[%s0 + $0x8] sm:$0xff]
    %v78 = vld [vmem:[%s0 + $0x10] sm:$0xff]
    %v79 = vld [vmem:[%s0 + $0x18] sm:$0xff]
    %v80 = vld [vmem:[%s0 + $0x20] sm:$0xff]
    %v81 = vld [vmem:[%s0 + $0x28] sm:$0xff]
    %v82 = vld [vmem:[%s0 + $0x30] sm:$0xff]
    %v83 = vld [vmem:[%s0 + $0x38] sm:$0xff]
    %v84 = vld [vmem:[%s0 + $0x40] sm:$0xff]
    %v85 = vld [vmem:[%s0 + $0x48] sm:$0xff]
    %v86 = vld [vmem:[%s0 + $0x50] sm:$0xff]
    %v87 = vld [vmem:[%s0 + $0x58] sm:$0xff]
    %v88 = vld [vmem:[%s0 + $0x60] sm:$0xff]
    %v89 = vld [vmem:[%s0 + $0x68] sm:$0xff]
    %v90 = vld [vmem:[%s0 + $0x70] sm:$0xff]
    %v91 = vld [vmem:[%s0 + $0x78] sm:$0xff]
    %v92 = vld [vmem:[%s0 + $0x80] sm:$0xff]
    %v93 = vld [vmem:[%s0 + $0x88] sm:$0xff]
    %v94 = vld [vmem:[%s0 + $0x90] sm:$0xff]
    %v95 = vld [vmem:[%s0 + $0x98] sm:$0xff]
    %v96 = vld [vmem:[%s0 + $0xa0] sm:$0xff]
    %v97 = vld [vmem:[%s0 + $0xa8] sm:$0xff]
    %v98 = vld [vmem:[%s0 + $0xb0] sm:$0xff]
    %v99 = vld [vmem:[%s0 + $0xb8] sm:$0xff]
    %v100 = vld [vmem:[%s0 + $0xc0] sm:$0xff]
    %v101 = vld [vmem:[%s0 + $0xc8] sm:$0xff]
    %v102 = vld [vmem:[%s0 + $0xd0] sm:$0xff]
    %v103 = vld [vmem:[%s0 + $0xd8] sm:$0xff]
    %v104 = vld [vmem:[%s0 + $0xe0] sm:$0xff]
    %v105 = vld [vmem:[%s0 + $0xe8] sm:$0xff]
    %v106 = vld [vmem:[%s0 + $0xf0] sm:$0xff]
    %v107 = vld [vmem:[%s0 + $0xf8] sm:$0xff]
    %v108 = vld [vmem:[%s1] sm:$0xff]
    %v109 = vld [vmem:[%s1 + $0x8] sm:$0xff]
    %v110 = vld [vmem:[%s1 + $0x10] sm:$0xff]
    %v111 = vld [vmem:[%s1 + $0x18] sm:$0xff]
    %v112 = vld [vmem:[%s1 + $0x20] sm:$0xff]
    %v113 = vld [vmem:[%s1 + $0x28] sm:$0xff]
    %v114 = vld [vmem:[%s1 + $0x30] sm:$0xff]
    %v115 = vld [vmem:[%s1 + $0x38] sm:$0xff]
    %v116 = vld [vmem:[%s1 + $0x40] sm:$0xff]
    %v117 = vld [vmem:[%s1 + $0x48] sm:$0xff]
    %v118 = vld [vmem:[%s1 + $0x50] sm:$0xff]
    %v119 = vld [vmem:[%s1 + $0x58] sm:$0xff]
    %v120 = vld [vmem:[%s1 + $0x60] sm:$0xff]
    %v121 = vld [vmem:[%s1 + $0x68] sm:$0xff]
    %v122 = vld [vmem:[%s1 + $0x70] sm:$0xff]
    %v123 = vld [vmem:[%s1 + $0x78] sm:$0xff]
    %v124 = vld [vmem:[#allocation2] sm:$0x1]
    %v126 = vperm.slane %v124, 0
    %128 = vmatpush.msra.mxu0 %v123
    %129 = vmatpush.msra.mxu0 %v122
    %130 = vmatpush.msra.mxu0 %v121
    %131 = vmatpush.msra.mxu0 %v120
    %132 = vmatpush.msra.mxu0 %v119
    %133 = vmatpush.msra.mxu0 %v118
    %134 = vmatpush.msra.mxu0 %v117
    %135 = vmatpush.msra.mxu0 %v116
    %136 = vmatpush.msra.mxu0 %v115
    %137 = vmatpush.msra.mxu0 %v114
    %138 = vmatpush.msra.mxu0 %v113
    %139 = vmatpush.msra.mxu0 %v112
    %140 = vmatpush.msra.mxu0 %v111
    %141 = vmatpush.msra.mxu0 %v110
    %142 = vmatpush.msra.mxu0 %v109
    %143 = vmatpush.msra.mxu0 %v108
    %144 = vmatmul.f32.gmra.mxu0 %v76
    %v145 = vpop.f32.mrf.mxu0
    %v146 = vadd.f32 %v126, %v145
    %147 = vmatmul.f32.gmra.mxu0 %v77
    %v148 = vpop.f32.mrf.mxu0
    %v149 = vadd.f32 %v126, %v148
    %150 = vmatmul.f32.gmra.mxu0 %v78
    %v151 = vpop.f32.mrf.mxu0
    %v152 = vadd.f32 %v126, %v151
    %153 = vmatmul.f32.gmra.mxu0 %v79
    %v154 = vpop.f32.mrf.mxu0
    %v155 = vadd.f32 %v126, %v154
    %156 = vmatmul.f32.gmra.mxu0 %v80
    %v157 = vpop.f32.mrf.mxu0
    %v158 = vadd.f32 %v126, %v157
    %159 = vmatmul.f32.gmra.mxu0 %v81
    %v160 = vpop.f32.mrf.mxu0
    %v161 = vadd.f32 %v126, %v160
    %162 = vmatmul.f32.gmra.mxu0 %v82
    %v163 = vpop.f32.mrf.mxu0
    %v164 = vadd.f32 %v126, %v163
    %165 = vmatmul.f32.gmra.mxu0 %v83
    %v166 = vpop.f32.mrf.mxu0
    %v167 = vadd.f32 %v126, %v166
    %168 = vmatmul.f32.gmra.mxu0 %v84
    %v169 = vpop.f32.mrf.mxu0
    %v170 = vadd.f32 %v126, %v169
    %171 = vmatmul.f32.gmra.mxu0 %v85
    %v172 = vpop.f32.mrf.mxu0
    %v173 = vadd.f32 %v126, %v172
    %174 = vmatmul.f32.gmra.mxu0 %v86
    %v175 = vpop.f32.mrf.mxu0
    %v176 = vadd.f32 %v126, %v175
    %177 = vmatmul.f32.gmra.mxu0 %v87
    %v178 = vpop.f32.mrf.mxu0
    %v179 = vadd.f32 %v126, %v178
    %180 = vmatmul.f32.gmra.mxu0 %v88
    %v181 = vpop.f32.mrf.mxu0
    %v182 = vadd.f32 %v126, %v181
    %183 = vmatmul.f32.gmra.mxu0 %v89
    %v184 = vpop.f32.mrf.mxu0
    %v185 = vadd.f32 %v126, %v184
    %186 = vmatmul.f32.gmra.mxu0 %v90
    %v187 = vpop.f32.mrf.mxu0
    %v188 = vadd.f32 %v126, %v187
    %189 = vmatmul.f32.gmra.mxu0 %v91
    %v190 = vpop.f32.mrf.mxu0
    %v191 = vadd.f32 %v126, %v190
    %192 = vmatmul.f32.gmra.mxu0 %v92
    %v193 = vpop.f32.mrf.mxu0
    %v194 = vadd.f32 %v126, %v193
    %195 = vmatmul.f32.gmra.mxu0 %v93
    %v196 = vpop.f32.mrf.mxu0
    %v197 = vadd.f32 %v126, %v196
    %198 = vmatmul.f32.gmra.mxu0 %v94
    %v199 = vpop.f32.mrf.mxu0
    %v200 = vadd.f32 %v126, %v199
    %201 = vmatmul.f32.gmra.mxu0 %v95
    %v202 = vpop.f32.mrf.mxu0
    %v203 = vadd.f32 %v126, %v202
    %204 = vmatmul.f32.gmra.mxu0 %v96
    %v205 = vpop.f32.mrf.mxu0
    %v206 = vadd.f32 %v126, %v205
    %207 = vmatmul.f32.gmra.mxu0 %v97
    %v208 = vpop.f32.mrf.mxu0
    %v209 = vadd.f32 %v126, %v208
    %210 = vmatmul.f32.gmra.mxu0 %v98
    %v211 = vpop.f32.mrf.mxu0
    %v212 = vadd.f32 %v126, %v211
    %213 = vmatmul.f32.gmra.mxu0 %v99
    %v214 = vpop.f32.mrf.mxu0
    %v215 = vadd.f32 %v126, %v214
    %216 = vmatmul.f32.gmra.mxu0 %v100
    %v217 = vpop.f32.mrf.mxu0
    %v218 = vadd.f32 %v126, %v217
    %219 = vmatmul.f32.gmra.mxu0 %v101
    %v220 = vpop.f32.mrf.mxu0
    %v221 = vadd.f32 %v126, %v220
    %222 = vmatmul.f32.gmra.mxu0 %v102
    %v223 = vpop.f32.mrf.mxu0
    %v224 = vadd.f32 %v126, %v223
    %225 = vmatmul.f32.gmra.mxu0 %v103
    %v226 = vpop.f32.mrf.mxu0
    %v227 = vadd.f32 %v126, %v226
    %228 = vmatmul.f32.gmra.mxu0 %v104
    %v229 = vpop.f32.mrf.mxu0
    %v230 = vadd.f32 %v126, %v229
    %231 = vmatmul.f32.gmra.mxu0 %v105
    %v232 = vpop.f32.mrf.mxu0
    %v233 = vadd.f32 %v126, %v232
    %234 = vmatmul.f32.gmra.mxu0 %v106
    %v235 = vpop.f32.mrf.mxu0
    %v236 = vadd.f32 %v126, %v235
    %237 = vmatmul.f32.gmra.mxu0 %v107
    %v238 = vpop.f32.mrf.mxu0
    %v239 = vadd.f32 %v126, %v238
    %240 = vdwg.mxu0
    %v241 = vmax.f32 %v146, 0.0
    %v242 = vmax.f32 %v149, 0.0
    %v243 = vmax.f32 %v152, 0.0
    %v244 = vmax.f32 %v155, 0.0
    %v245 = vmax.f32 %v158, 0.0
    %v246 = vmax.f32 %v161, 0.0
    %v247 = vmax.f32 %v164, 0.0
    %v248 = vmax.f32 %v167, 0.0
    %v249 = vmax.f32 %v170, 0.0
    %v250 = vmax.f32 %v173, 0.0
    %v251 = vmax.f32 %v176, 0.0
    %v252 = vmax.f32 %v179, 0.0
    %v253 = vmax.f32 %v182, 0.0
    %v254 = vmax.f32 %v185, 0.0
    %v255 = vmax.f32 %v188, 0.0
    %v256 = vmax.f32 %v191, 0.0
    %v257 = vmax.f32 %v194, 0.0
    %v258 = vmax.f32 %v197, 0.0
    %v259 = vmax.f32 %v200, 0.0
    %v260 = vmax.f32 %v203, 0.0
    %v261 = vmax.f32 %v206, 0.0
    %v262 = vmax.f32 %v209, 0.0
    %v263 = vmax.f32 %v212, 0.0
    %v264 = vmax.f32 %v215, 0.0
    %v265 = vmax.f32 %v218, 0.0
    %v266 = vmax.f32 %v221, 0.0
    %v267 = vmax.f32 %v224, 0.0
    %v268 = vmax.f32 %v227, 0.0
    %v269 = vmax.f32 %v230, 0.0
    %v270 = vmax.f32 %v233, 0.0
    %v271 = vmax.f32 %v236, 0.0
    %v272 = vmax.f32 %v239, 0.0
    %v273 = vld [vmem:[%s3] sm:$0xff]
    %v274 = vld [vmem:[%s3 + $0x8] sm:$0xff]
    %v275 = vld [vmem:[%s3 + $0x10] sm:$0xff]
    %v276 = vld [vmem:[%s3 + $0x18] sm:$0xff]
    %v277 = vld [vmem:[%s3 + $0x20] sm:$0xff]
    %v278 = vld [vmem:[%s3 + $0x28] sm:$0xff]
    %v279 = vld [vmem:[%s3 + $0x30] sm:$0xff]
    %v280 = vld [vmem:[%s3 + $0x38] sm:$0xff]
    %v281 = vld [vmem:[%s3 + $0x40] sm:$0xff]
    %v282 = vld [vmem:[%s3 + $0x48] sm:$0xff]
    %v283 = vld [vmem:[%s3 + $0x50] sm:$0xff]
    %v284 = vld [vmem:[%s3 + $0x58] sm:$0xff]
    %v285 = vld [vmem:[%s3 + $0x60] sm:$0xff]
    %v286 = vld [vmem:[%s3 + $0x68] sm:$0xff]
    %v287 = vld [vmem:[%s3 + $0x70] sm:$0xff]
    %v288 = vld [vmem:[%s3 + $0x78] sm:$0xff]
    %v289 = vld [vmem:[#allocation5] sm:$0x1]
    %v291 = vperm.slane %v289, 0
    %293 = vmatpush.msra.mxu0 %v288
    %294 = vmatpush.msra.mxu0 %v287
    %295 = vmatpush.msra.mxu0 %v286
    %296 = vmatpush.msra.mxu0 %v285
    %297 = vmatpush.msra.mxu0 %v284
    %298 = vmatpush.msra.mxu0 %v283
    %299 = vmatpush.msra.mxu0 %v282
    %300 = vmatpush.msra.mxu0 %v281
    %301 = vmatpush.msra.mxu0 %v280
    %302 = vmatpush.msra.mxu0 %v279
    %303 = vmatpush.msra.mxu0 %v278
    %304 = vmatpush.msra.mxu0 %v277
    %305 = vmatpush.msra.mxu0 %v276
    %306 = vmatpush.msra.mxu0 %v275
    %307 = vmatpush.msra.mxu0 %v274
    %308 = vmatpush.msra.mxu0 %v273
    %309 = vmatmul.f32.gmra.mxu0 %v241
    %v310 = vpop.f32.mrf.mxu0
    %v311 = vadd.f32 %v291, %v310
    %312 = vmatmul.f32.gmra.mxu0 %v242
    %v313 = vpop.f32.mrf.mxu0
    %v314 = vadd.f32 %v291, %v313
    %315 = vmatmul.f32.gmra.mxu0 %v243
    %v316 = vpop.f32.mrf.mxu0
    %v317 = vadd.f32 %v291, %v316
    %318 = vmatmul.f32.gmra.mxu0 %v244
    %v319 = vpop.f32.mrf.mxu0
    %v320 = vadd.f32 %v291, %v319
    %321 = vmatmul.f32.gmra.mxu0 %v245
    %v322 = vpop.f32.mrf.mxu0
    %v323 = vadd.f32 %v291, %v322
    %324 = vmatmul.f32.gmra.mxu0 %v246
    %v325 = vpop.f32.mrf.mxu0
    %v326 = vadd.f32 %v291, %v325
    %327 = vmatmul.f32.gmra.mxu0 %v247
    %v328 = vpop.f32.mrf.mxu0
    %v329 = vadd.f32 %v291, %v328
    %330 = vmatmul.f32.gmra.mxu0 %v248
    %v331 = vpop.f32.mrf.mxu0
    %v332 = vadd.f32 %v291, %v331
    %333 = vmatmul.f32.gmra.mxu0 %v249
    %v334 = vpop.f32.mrf.mxu0
    %v335 = vadd.f32 %v291, %v334
    %336 = vmatmul.f32.gmra.mxu0 %v250
    %v337 = vpop.f32.mrf.mxu0
    %v338 = vadd.f32 %v291, %v337
    %339 = vmatmul.f32.gmra.mxu0 %v251
    %v340 = vpop.f32.mrf.mxu0
    %v341 = vadd.f32 %v291, %v340
    %342 = vmatmul.f32.gmra.mxu0 %v252
    %v343 = vpop.f32.mrf.mxu0
    %v344 = vadd.f32 %v291, %v343
    %345 = vmatmul.f32.gmra.mxu0 %v253
    %v346 = vpop.f32.mrf.mxu0
    %v347 = vadd.f32 %v291, %v346
    %348 = vmatmul.f32.gmra.mxu0 %v254
    %v349 = vpop.f32.mrf.mxu0
    %v350 = vadd.f32 %v291, %v349
    %351 = vmatmul.f32.gmra.mxu0 %v255
    %v352 = vpop.f32.mrf.mxu0
    %v353 = vadd.f32 %v291, %v352
    %354 = vmatmul.f32.gmra.mxu0 %v256
    %v355 = vpop.f32.mrf.mxu0
    %v356 = vadd.f32 %v291, %v355
    %357 = vmatmul.f32.gmra.mxu0 %v257
    %v358 = vpop.f32.mrf.mxu0
    %v359 = vadd.f32 %v291, %v358
    %360 = vmatmul.f32.gmra.mxu0 %v258
    %v361 = vpop.f32.mrf.mxu0
    %v362 = vadd.f32 %v291, %v361
    %363 = vmatmul.f32.gmra.mxu0 %v259
    %v364 = vpop.f32.mrf.mxu0
    %v365 = vadd.f32 %v291, %v364
    %366 = vmatmul.f32.gmra.mxu0 %v260
    %v367 = vpop.f32.mrf.mxu0
    %v368 = vadd.f32 %v291, %v367
    %369 = vmatmul.f32.gmra.mxu0 %v261
    %v370 = vpop.f32.mrf.mxu0
    %v371 = vadd.f32 %v291, %v370
    %372 = vmatmul.f32.gmra.mxu0 %v262
    %v373 = vpop.f32.mrf.mxu0
    %v374 = vadd.f32 %v291, %v373
    %375 = vmatmul.f32.gmra.mxu0 %v263
    %v376 = vpop.f32.mrf.mxu0
    %v377 = vadd.f32 %v291, %v376
    %378 = vmatmul.f32.gmra.mxu0 %v264
    %v379 = vpop.f32.mrf.mxu0
    %v380 = vadd.f32 %v291, %v379
    %381 = vmatmul.f32.gmra.mxu0 %v265
    %v382 = vpop.f32.mrf.mxu0
    %v383 = vadd.f32 %v291, %v382
    %384 = vmatmul.f32.gmra.mxu0 %v266
    %v385 = vpop.f32.mrf.mxu0
    %v386 = vadd.f32 %v291, %v385
    %387 = vmatmul.f32.gmra.mxu0 %v267
    %v388 = vpop.f32.mrf.mxu0
    %v389 = vadd.f32 %v291, %v388
    %390 = vmatmul.f32.gmra.mxu0 %v268
    %v391 = vpop.f32.mrf.mxu0
    %v392 = vadd.f32 %v291, %v391
    %393 = vmatmul.f32.gmra.mxu0 %v269
    %v394 = vpop.f32.mrf.mxu0
    %v395 = vadd.f32 %v291, %v394
    %396 = vmatmul.f32.gmra.mxu0 %v270
    %v397 = vpop.f32.mrf.mxu0
    %v398 = vadd.f32 %v291, %v397
    %399 = vmatmul.f32.gmra.mxu0 %v271
    %v400 = vpop.f32.mrf.mxu0
    %v401 = vadd.f32 %v291, %v400
    %402 = vmatmul.f32.gmra.mxu0 %v272
    %v403 = vpop.f32.mrf.mxu0
    %v404 = vadd.f32 %v291, %v403
    %405 = vdwg.mxu0
    %v406 = vmul.f32 %v311, 0.5
    %v407 = vmul.f32 %v314, 0.5
    %v408 = vmul.f32 %v317, 0.5
    %v409 = vmul.f32 %v320, 0.5
    %v410 = vmul.f32 %v323, 0.5
    %v411 = vmul.f32 %v326, 0.5
    %v412 = vmul.f32 %v329, 0.5
    %v413 = vmul.f32 %v332, 0.5
    %v414 = vmul.f32 %v335, 0.5
    %v415 = vmul.f32 %v338, 0.5
    %v416 = vmul.f32 %v341, 0.5
    %v417 = vmul.f32 %v344, 0.5
    %v418 = vmul.f32 %v347, 0.5
    %v419 = vmul.f32 %v350, 0.5
    %v420 = vmul.f32 %v353, 0.5
    %v421 = vmul.f32 %v356, 0.5
    %v422 = vmul.f32 %v359, 0.5
    %v423 = vmul.f32 %v362, 0.5
    %v424 = vmul.f32 %v365, 0.5
    %v425 = vmul.f32 %v368, 0.5
    %v426 = vmul.f32 %v371, 0.5
    %v427 = vmul.f32 %v374, 0.5
    %v428 = vmul.f32 %v377, 0.5
    %v429 = vmul.f32 %v380, 0.5
    %v430 = vmul.f32 %v383, 0.5
    %v431 = vmul.f32 %v386, 0.5
    %v432 = vmul.f32 %v389, 0.5
    %v433 = vmul.f32 %v392, 0.5
    %v434 = vmul.f32 %v395, 0.5
    %v435 = vmul.f32 %v398, 0.5
    %v436 = vmul.f32 %v401, 0.5
    %v437 = vmul.f32 %v404, 0.5
    %v438 = vmul.f32 %v406, 1.442695
    %v439 = vpow.pop %v438
    %v440 = vmul.f32 %v407, 1.442695
    %v441 = vpow.pop %v440
    %v442 = vmul.f32 %v408, 1.442695
    %v443 = vpow.pop %v442
    %v444 = vmul.f32 %v409, 1.442695
    %v445 = vpow.pop %v444
    %v446 = vmul.f32 %v410, 1.442695
    %v447 = vpow.pop %v446
    %v448 = vmul.f32 %v411, 1.442695
    %v449 = vpow.pop %v448
    %v450 = vmul.f32 %v412, 1.442695
    %v451 = vpow.pop %v450
    %v452 = vmul.f32 %v413, 1.442695
    %v453 = vpow.pop %v452
    %v454 = vmul.f32 %v414, 1.442695
    %v455 = vpow.pop %v454
    %v456 = vmul.f32 %v415, 1.442695
    %v457 = vpow.pop %v456
    %v458 = vmul.f32 %v416, 1.442695
    %v459 = vpow.pop %v458
    %v460 = vmul.f32 %v417, 1.442695
    %v461 = vpow.pop %v460
    %v462 = vmul.f32 %v418, 1.442695
    %v463 = vpow.pop %v462
    %v464 = vmul.f32 %v419, 1.442695
    %v465 = vpow.pop %v464
    %v466 = vmul.f32 %v420, 1.442695
    %v467 = vpow.pop %v466
    %v468 = vmul.f32 %v421, 1.442695
    %v469 = vpow.pop %v468
    %v470 = vmul.f32 %v422, 1.442695
    %v471 = vpow.pop %v470
    %v472 = vmul.f32 %v423, 1.442695
    %v473 = vpow.pop %v472
    %v474 = vmul.f32 %v424, 1.442695
    %v475 = vpow.pop %v474
    %v476 = vmul.f32 %v425, 1.442695
    %v477 = vpow.pop %v476
    %v478 = vmul.f32 %v426, 1.442695
    %v479 = vpow.pop %v478
    %v480 = vmul.f32 %v427, 1.442695
    %v481 = vpow.pop %v480
    %v482 = vmul.f32 %v428, 1.442695
    %v483 = vpow.pop %v482
    %v484 = vmul.f32 %v429, 1.442695
    %v485 = vpow.pop %v484
    %v486 = vmul.f32 %v430, 1.442695
    %v487 = vpow.pop %v486
    %v488 = vmul.f32 %v431, 1.442695
    %v489 = vpow.pop %v488
    %v490 = vmul.f32 %v432, 1.442695
    %v491 = vpow.pop %v490
    %v492 = vmul.f32 %v433, 1.442695
    %v493 = vpow.pop %v492
    %v494 = vmul.f32 %v434, 1.442695
    %v495 = vpow.pop %v494
    %v496 = vmul.f32 %v435, 1.442695
    %v497 = vpow.pop %v496
    %v498 = vmul.f32 %v436, 1.442695
    %v499 = vpow.pop %v498
    %v500 = vmul.f32 %v437, 1.442695
    %v501 = vpow.pop %v500
    %534 = vrot.lane.b32.xlu0 %v439, 32
    %v535 = vpop.permute.xlu0 %534
    %536 = vrot.lane.b32.xlu0 %v441, 32
    %v537 = vpop.permute.xlu0 %536
    %538 = vrot.lane.b32.xlu0 %v443, 32
    %v539 = vpop.permute.xlu0 %538
    %540 = vrot.lane.b32.xlu0 %v445, 32
    %v541 = vpop.permute.xlu0 %540
    %542 = vrot.lane.b32.xlu0 %v447, 32
    %v543 = vpop.permute.xlu0 %542
    %544 = vrot.lane.b32.xlu0 %v449, 32
    %v545 = vpop.permute.xlu0 %544
    %546 = vrot.lane.b32.xlu0 %v451, 32
    %v547 = vpop.permute.xlu0 %546
    %548 = vrot.lane.b32.xlu0 %v453, 32
    %v549 = vpop.permute.xlu0 %548
    %550 = vrot.lane.b32.xlu0 %v455, 32
    %v551 = vpop.permute.xlu0 %550
    %552 = vrot.lane.b32.xlu0 %v457, 32
    %v553 = vpop.permute.xlu0 %552
    %554 = vrot.lane.b32.xlu0 %v459, 32
    %v555 = vpop.permute.xlu0 %554
    %556 = vrot.lane.b32.xlu0 %v461, 32
    %v557 = vpop.permute.xlu0 %556
    %558 = vrot.lane.b32.xlu0 %v463, 32
    %v559 = vpop.permute.xlu0 %558
    %560 = vrot.lane.b32.xlu0 %v465, 32
    %v561 = vpop.permute.xlu0 %560
    %562 = vrot.lane.b32.xlu0 %v467, 32
    %v563 = vpop.permute.xlu0 %562
    %564 = vrot.lane.b32.xlu0 %v469, 32
    %v565 = vpop.permute.xlu0 %564
    %566 = vrot.lane.b32.xlu0 %v471, 32
    %v567 = vpop.permute.xlu0 %566
    %568 = vrot.lane.b32.xlu0 %v473, 32
    %v569 = vpop.permute.xlu0 %568
    %570 = vrot.lane.b32.xlu0 %v475, 32
    %v571 = vpop.permute.xlu0 %570
    %572 = vrot.lane.b32.xlu0 %v477, 32
    %v573 = vpop.permute.xlu0 %572
    %574 = vrot.lane.b32.xlu0 %v479, 32
    %v575 = vpop.permute.xlu0 %574
    %576 = vrot.lane.b32.xlu0 %v481, 32
    %v577 = vpop.permute.xlu0 %576
    %578 = vrot.lane.b32.xlu0 %v483, 32
    %v579 = vpop.permute.xlu0 %578
    %580 = vrot.lane.b32.xlu0 %v485, 32
    %v581 = vpop.permute.xlu0 %580
    %582 = vrot.lane.b32.xlu0 %v487, 32
    %v583 = vpop.permute.xlu0 %582
    %584 = vrot.lane.b32.xlu0 %v489, 32
    %v585 = vpop.permute.xlu0 %584
    %586 = vrot.lane.b32.xlu0 %v491, 32
    %v587 = vpop.permute.xlu0 %586
    %588 = vrot.lane.b32.xlu0 %v493, 32
    %v589 = vpop.permute.xlu0 %588
    %590 = vrot.lane.b32.xlu0 %v495, 32
    %v591 = vpop.permute.xlu0 %590
    %592 = vrot.lane.b32.xlu0 %v497, 32
    %v593 = vpop.permute.xlu0 %592
    %594 = vrot.lane.b32.xlu0 %v499, 32
    %v595 = vpop.permute.xlu0 %594
    %596 = vrot.lane.b32.xlu0 %v501, 32
    %v597 = vpop.permute.xlu0 %596
    %v630 = vmul.f32 %v76, %v535
    %v631 = vmul.f32 %v77, %v537
    %v632 = vmul.f32 %v78, %v539
    %v633 = vmul.f32 %v79, %v541
    %v634 = vmul.f32 %v80, %v543
    %v635 = vmul.f32 %v81, %v545
    %v636 = vmul.f32 %v82, %v547
    %v637 = vmul.f32 %v83, %v549
    %v638 = vmul.f32 %v84, %v551
    %v639 = vmul.f32 %v85, %v553
    %v640 = vmul.f32 %v86, %v555
    %v641 = vmul.f32 %v87, %v557
    %v642 = vmul.f32 %v88, %v559
    %v643 = vmul.f32 %v89, %v561
    %v644 = vmul.f32 %v90, %v563
    %v645 = vmul.f32 %v91, %v565
    %v646 = vmul.f32 %v92, %v567
    %v647 = vmul.f32 %v93, %v569
    %v648 = vmul.f32 %v94, %v571
    %v649 = vmul.f32 %v95, %v573
    %v650 = vmul.f32 %v96, %v575
    %v651 = vmul.f32 %v97, %v577
    %v652 = vmul.f32 %v98, %v579
    %v653 = vmul.f32 %v99, %v581
    %v654 = vmul.f32 %v100, %v583
    %v655 = vmul.f32 %v101, %v585
    %v656 = vmul.f32 %v102, %v587
    %v657 = vmul.f32 %v103, %v589
    %v658 = vmul.f32 %v104, %v591
    %v659 = vmul.f32 %v105, %v593
    %v660 = vmul.f32 %v106, %v595
    %v661 = vmul.f32 %v107, %v597
    %694 = vrot.lane.b32.xlu0 %v630, 64
    %v695 = vpop.permute.xlu0 %694
    %696 = vrot.lane.b32.xlu0 %v631, 64
    %v697 = vpop.permute.xlu0 %696
    %698 = vrot.lane.b32.xlu0 %v632, 64
    %v699 = vpop.permute.xlu0 %698
    %700 = vrot.lane.b32.xlu0 %v633, 64
    %v701 = vpop.permute.xlu0 %700
    %702 = vrot.lane.b32.xlu0 %v634, 64
    %v703 = vpop.permute.xlu0 %702
    %704 = vrot.lane.b32.xlu0 %v635, 64
    %v705 = vpop.permute.xlu0 %704
    %706 = vrot.lane.b32.xlu0 %v636, 64
    %v707 = vpop.permute.xlu0 %706
    %708 = vrot.lane.b32.xlu0 %v637, 64
    %v709 = vpop.permute.xlu0 %708
    %710 = vrot.lane.b32.xlu0 %v638, 64
    %v711 = vpop.permute.xlu0 %710
    %712 = vrot.lane.b32.xlu0 %v639, 64
    %v713 = vpop.permute.xlu0 %712
    %714 = vrot.lane.b32.xlu0 %v640, 64
    %v715 = vpop.permute.xlu0 %714
    %716 = vrot.lane.b32.xlu0 %v641, 64
    %v717 = vpop.permute.xlu0 %716
    %718 = vrot.lane.b32.xlu0 %v642, 64
    %v719 = vpop.permute.xlu0 %718
    %720 = vrot.lane.b32.xlu0 %v643, 64
    %v721 = vpop.permute.xlu0 %720
    %722 = vrot.lane.b32.xlu0 %v644, 64
    %v723 = vpop.permute.xlu0 %722
    %724 = vrot.lane.b32.xlu0 %v645, 64
    %v725 = vpop.permute.xlu0 %724
    %726 = vrot.lane.b32.xlu0 %v646, 64
    %v727 = vpop.permute.xlu0 %726
    %728 = vrot.lane.b32.xlu0 %v647, 64
    %v729 = vpop.permute.xlu0 %728
    %730 = vrot.lane.b32.xlu0 %v648, 64
    %v731 = vpop.permute.xlu0 %730
    %732 = vrot.lane.b32.xlu0 %v649, 64
    %v733 = vpop.permute.xlu0 %732
    %734 = vrot.lane.b32.xlu0 %v650, 64
    %v735 = vpop.permute.xlu0 %734
    %736 = vrot.lane.b32.xlu0 %v651, 64
    %v737 = vpop.permute.xlu0 %736
    %738 = vrot.lane.b32.xlu0 %v652, 64
    %v739 = vpop.permute.xlu0 %738
    %740 = vrot.lane.b32.xlu0 %v653, 64
    %v741 = vpop.permute.xlu0 %740
    %742 = vrot.lane.b32.xlu0 %v654, 64
    %v743 = vpop.permute.xlu0 %742
    %744 = vrot.lane.b32.xlu0 %v655, 64
    %v745 = vpop.permute.xlu0 %744
    %746 = vrot.lane.b32.xlu0 %v656, 64
    %v747 = vpop.permute.xlu0 %746
    %748 = vrot.lane.b32.xlu0 %v657, 64
    %v749 = vpop.permute.xlu0 %748
    %750 = vrot.lane.b32.xlu0 %v658, 64
    %v751 = vpop.permute.xlu0 %750
    %752 = vrot.lane.b32.xlu0 %v659, 64
    %v753 = vpop.permute.xlu0 %752
    %754 = vrot.lane.b32.xlu0 %v660, 64
    %v755 = vpop.permute.xlu0 %754
    %756 = vrot.lane.b32.xlu0 %v661, 64
    %v757 = vpop.permute.xlu0 %756
    %v790 = vadd.f32 %v311, %v695
    %v791 = vadd.f32 %v314, %v697
    %v792 = vadd.f32 %v317, %v699
    %v793 = vadd.f32 %v320, %v701
    %v794 = vadd.f32 %v323, %v703
    %v795 = vadd.f32 %v326, %v705
    %v796 = vadd.f32 %v329, %v707
    %v797 = vadd.f32 %v332, %v709
    %v798 = vadd.f32 %v335, %v711
    %v799 = vadd.f32 %v338, %v713
    %v800 = vadd.f32 %v341, %v715
    %v801 = vadd.f32 %v344, %v717
    %v802 = vadd.f32 %v347, %v719
    %v803 = vadd.f32 %v350, %v721
    %v804 = vadd.f32 %v353, %v723
    %v805 = vadd.f32 %v356, %v725
    %v806 = vadd.f32 %v359, %v727
    %v807 = vadd.f32 %v362, %v729
    %v808 = vadd.f32 %v365, %v731
    %v809 = vadd.f32 %v368, %v733
    %v810 = vadd.f32 %v371, %v735
    %v811 = vadd.f32 %v374, %v737
    %v812 = vadd.f32 %v377, %v739
    %v813 = vadd.f32 %v380, %v741
    %v814 = vadd.f32 %v383, %v743
    %v815 = vadd.f32 %v386, %v745
    %v816 = vadd.f32 %v389, %v747
    %v817 = vadd.f32 %v392, %v749
    %v818 = vadd.f32 %v395, %v751
    %v819 = vadd.f32 %v398, %v753
    %v820 = vadd.f32 %v401, %v755
    %v821 = vadd.f32 %v404, %v757
    %v822 = vld [vmem:[#allocation7] sm:$0xff]
    %v823 = vld [vmem:[#allocation7 + $0x8] sm:$0xff]
    %v824 = vld [vmem:[#allocation7 + $0x10] sm:$0xff]
    %v825 = vld [vmem:[#allocation7 + $0x18] sm:$0xff]
    %v826 = vld [vmem:[%s6] sm:$0x1]
    %v828 = vperm.slane %v826, 0
    %vm830 = vcmask 261120
    %v832 = vsel %vm830, %v790, 0
    %v835 = vsel %vm830, %v791, 0
    %v838 = vsel %vm830, %v792, 0
    %v841 = vsel %vm830, %v793, 0
    %v844 = vsel %vm830, %v794, 0
    %v847 = vsel %vm830, %v795, 0
    %v850 = vsel %vm830, %v796, 0
    %v853 = vsel %vm830, %v797, 0
    %v856 = vsel %vm830, %v798, 0
    %v859 = vsel %vm830, %v799, 0
    %v862 = vsel %vm830, %v800, 0
    %v865 = vsel %vm830, %v801, 0
    %v868 = vsel %vm830, %v802, 0
    %v871 = vsel %vm830, %v803, 0
    %v874 = vsel %vm830, %v804, 0
    %v877 = vsel %vm830, %v805, 0
    %v880 = vsel %vm830, %v806, 0
    %v883 = vsel %vm830, %v807, 0
    %v886 = vsel %vm830, %v808, 0
    %v889 = vsel %vm830, %v809, 0
    %v892 = vsel %vm830, %v810, 0
    %v895 = vsel %vm830, %v811, 0
    %v898 = vsel %vm830, %v812, 0
    %v901 = vsel %vm830, %v813, 0
    %v904 = vsel %vm830, %v814, 0
    %v907 = vsel %vm830, %v815, 0
    %v910 = vsel %vm830, %v816, 0
    %v913 = vsel %vm830, %v817, 0
    %v916 = vsel %vm830, %v818, 0
    %v919 = vsel %vm830, %v819, 0
    %v922 = vsel %vm830, %v820, 0
    %v925 = vsel %vm830, %v821, 0
    %927 = vmatpush.msra.mxu0 0.0
    %928 = vmatpush.msra.mxu0 0.0
    %929 = vmatpush.msra.mxu0 0.0
    %930 = vmatpush.msra.mxu0 0.0
    %931 = vmatpush.msra.mxu0 0.0
    %932 = vmatpush.msra.mxu0 0.0
    %933 = vmatpush.msra.mxu0 0.0
    %934 = vmatpush.msra.mxu0 0.0
    %935 = vmatpush.msra.mxu0 0.0
    %936 = vmatpush.msra.mxu0 0.0
    %937 = vmatpush.msra.mxu0 0.0
    %938 = vmatpush.msra.mxu0 0.0
    %939 = vmatpush.msra.mxu0 %v825
    %940 = vmatpush.msra.mxu0 %v824
    %941 = vmatpush.msra.mxu0 %v823
    %942 = vmatpush.msra.mxu0 %v822
    %943 = vmatmul.f32.gmra.mxu0 %v832
    %v944 = vpop.f32.mrf.mxu0
    %v945 = vadd.f32 %v828, %v944
    %946 = vmatmul.f32.gmra.mxu0 %v835
    %v947 = vpop.f32.mrf.mxu0
    %v948 = vadd.f32 %v828, %v947
    %949 = vmatmul.f32.gmra.mxu0 %v838
    %v950 = vpop.f32.mrf.mxu0
    %v951 = vadd.f32 %v828, %v950
    %952 = vmatmul.f32.gmra.mxu0 %v841
    %v953 = vpop.f32.mrf.mxu0
    %v954 = vadd.f32 %v828, %v953
    %955 = vmatmul.f32.gmra.mxu0 %v844
    %v956 = vpop.f32.mrf.mxu0
    %v957 = vadd.f32 %v828, %v956
    %958 = vmatmul.f32.gmra.mxu0 %v847
    %v959 = vpop.f32.mrf.mxu0
    %v960 = vadd.f32 %v828, %v959
    %961 = vmatmul.f32.gmra.mxu0 %v850
    %v962 = vpop.f32.mrf.mxu0
    %v963 = vadd.f32 %v828, %v962
    %964 = vmatmul.f32.gmra.mxu0 %v853
    %v965 = vpop.f32.mrf.mxu0
    %v966 = vadd.f32 %v828, %v965
    %967 = vmatmul.f32.gmra.mxu0 %v856
    %v968 = vpop.f32.mrf.mxu0
    %v969 = vadd.f32 %v828, %v968
    %970 = vmatmul.f32.gmra.mxu0 %v859
    %v971 = vpop.f32.mrf.mxu0
    %v972 = vadd.f32 %v828, %v971
    %973 = vmatmul.f32.gmra.mxu0 %v862
    %v974 = vpop.f32.mrf.mxu0
    %v975 = vadd.f32 %v828, %v974
    %976 = vmatmul.f32.gmra.mxu0 %v865
    %v977 = vpop.f32.mrf.mxu0
    %v978 = vadd.f32 %v828, %v977
    %979 = vmatmul.f32.gmra.mxu0 %v868
    %v980 = vpop.f32.mrf.mxu0
    %v981 = vadd.f32 %v828, %v980
    %982 = vmatmul.f32.gmra.mxu0 %v871
    %v983 = vpop.f32.mrf.mxu0
    %v984 = vadd.f32 %v828, %v983
    %985 = vmatmul.f32.gmra.mxu0 %v874
    %v986 = vpop.f32.mrf.mxu0
    %v987 = vadd.f32 %v828, %v986
    %988 = vmatmul.f32.gmra.mxu0 %v877
    %v989 = vpop.f32.mrf.mxu0
    %v990 = vadd.f32 %v828, %v989
    %991 = vmatmul.f32.gmra.mxu0 %v880
    %v992 = vpop.f32.mrf.mxu0
    %v993 = vadd.f32 %v828, %v992
    %994 = vmatmul.f32.gmra.mxu0 %v883
    %v995 = vpop.f32.mrf.mxu0
    %v996 = vadd.f32 %v828, %v995
    %997 = vmatmul.f32.gmra.mxu0 %v886
    %v998 = vpop.f32.mrf.mxu0
    %v999 = vadd.f32 %v828, %v998
    %1000 = vmatmul.f32.gmra.mxu0 %v889
    %v1001 = vpop.f32.mrf.mxu0
    %v1002 = vadd.f32 %v828, %v1001
    %1003 = vmatmul.f32.gmra.mxu0 %v892
    %v1004 = vpop.f32.mrf.mxu0
    %v1005 = vadd.f32 %v828, %v1004
    %1006 = vmatmul.f32.gmra.mxu0 %v895
    %v1007 = vpop.f32.mrf.mxu0
    %v1008 = vadd.f32 %v828, %v1007
    %1009 = vmatmul.f32.gmra.mxu0 %v898
    %v1010 = vpop.f32.mrf.mxu0
    %v1011 = vadd.f32 %v828, %v1010
    %1012 = vmatmul.f32.gmra.mxu0 %v901
    %v1013 = vpop.f32.mrf.mxu0
    %v1014 = vadd.f32 %v828, %v1013
    %1015 = vmatmul.f32.gmra.mxu0 %v904
    %v1016 = vpop.f32.mrf.mxu0
    %v1017 = vadd.f32 %v828, %v1016
    %1018 = vmatmul.f32.gmra.mxu0 %v907
    %v1019 = vpop.f32.mrf.mxu0
    %v1020 = vadd.f32 %v828, %v1019
    %1021 = vmatmul.f32.gmra.mxu0 %v910
    %v1022 = vpop.f32.mrf.mxu0
    %v1023 = vadd.f32 %v828, %v1022
    %1024 = vmatmul.f32.gmra.mxu0 %v913
    %v1025 = vpop.f32.mrf.mxu0
    %v1026 = vadd.f32 %v828, %v1025
    %1027 = vmatmul.f32.gmra.mxu0 %v916
    %v1028 = vpop.f32.mrf.mxu0
    %v1029 = vadd.f32 %v828, %v1028
    %1030 = vmatmul.f32.gmra.mxu0 %v919
    %v1031 = vpop.f32.mrf.mxu0
    %v1032 = vadd.f32 %v828, %v1031
    %1033 = vmatmul.f32.gmra.mxu0 %v922
    %v1034 = vpop.f32.mrf.mxu0
    %v1035 = vadd.f32 %v828, %v1034
    %1036 = vmatmul.f32.gmra.mxu0 %v925
    %v1037 = vpop.f32.mrf.mxu0
    %v1038 = vadd.f32 %v828, %v1037
    %1039 = vdwg.mxu0
    %v1040 = vmax.f32 %v945, 0.0
    %v1041 = vmax.f32 %v948, 0.0
    %v1042 = vmax.f32 %v951, 0.0
    %v1043 = vmax.f32 %v954, 0.0
    %v1044 = vmax.f32 %v957, 0.0
    %v1045 = vmax.f32 %v960, 0.0
    %v1046 = vmax.f32 %v963, 0.0
    %v1047 = vmax.f32 %v966, 0.0
    %v1048 = vmax.f32 %v969, 0.0
    %v1049 = vmax.f32 %v972, 0.0
    %v1050 = vmax.f32 %v975, 0.0
    %v1051 = vmax.f32 %v978, 0.0
    %v1052 = vmax.f32 %v981, 0.0
    %v1053 = vmax.f32 %v984, 0.0
    %v1054 = vmax.f32 %v987, 0.0
    %v1055 = vmax.f32 %v990, 0.0
    %v1056 = vmax.f32 %v993, 0.0
    %v1057 = vmax.f32 %v996, 0.0
    %v1058 = vmax.f32 %v999, 0.0
    %v1059 = vmax.f32 %v1002, 0.0
    %v1060 = vmax.f32 %v1005, 0.0
    %v1061 = vmax.f32 %v1008, 0.0
    %v1062 = vmax.f32 %v1011, 0.0
    %v1063 = vmax.f32 %v1014, 0.0
    %v1064 = vmax.f32 %v1017, 0.0
    %v1065 = vmax.f32 %v1020, 0.0
    %v1066 = vmax.f32 %v1023, 0.0
    %v1067 = vmax.f32 %v1026, 0.0
    %v1068 = vmax.f32 %v1029, 0.0
    %v1069 = vmax.f32 %v1032, 0.0
    %v1070 = vmax.f32 %v1035, 0.0
    %v1071 = vmax.f32 %v1038, 0.0
    %v1072 = vld [vmem:[%s7] sm:$0xff]
    %v1073 = vld [vmem:[%s7 + $0x8] sm:$0xff]
    %v1074 = vld [vmem:[%s7 + $0x10] sm:$0xff]
    %v1075 = vld [vmem:[%s7 + $0x18] sm:$0xff]
    %v1076 = vld [vmem:[%s7 + $0x20] sm:$0xff]
    %v1077 = vld [vmem:[%s7 + $0x28] sm:$0xff]
    %v1078 = vld [vmem:[%s7 + $0x30] sm:$0xff]
    %v1079 = vld [vmem:[%s7 + $0x38] sm:$0xff]
    %v1080 = vld [vmem:[%s7 + $0x40] sm:$0xff]
    %v1081 = vld [vmem:[%s7 + $0x48] sm:$0xff]
    %v1082 = vld [vmem:[%s7 + $0x50] sm:$0xff]
    %v1083 = vld [vmem:[%s7 + $0x58] sm:$0xff]
    %v1084 = vld [vmem:[%s7 + $0x60] sm:$0xff]
    %v1085 = vld [vmem:[%s7 + $0x68] sm:$0xff]
    %v1086 = vld [vmem:[%s7 + $0x70] sm:$0xff]
    %v1087 = vld [vmem:[%s7 + $0x78] sm:$0xff]
    %v1088 = vld [vmem:[%s8] sm:$0x1]
    %v1090 = vperm.slane %v1088, 0
    %1092 = vmatpush.msra.mxu0 %v1087
    %1093 = vmatpush.msra.mxu0 %v1086
    %1094 = vmatpush.msra.mxu0 %v1085
    %1095 = vmatpush.msra.mxu0 %v1084
    %1096 = vmatpush.msra.mxu0 %v1083
    %1097 = vmatpush.msra.mxu0 %v1082
    %1098 = vmatpush.msra.mxu0 %v1081
    %1099 = vmatpush.msra.mxu0 %v1080
    %1100 = vmatpush.msra.mxu0 %v1079
    %1101 = vmatpush.msra.mxu0 %v1078
    %1102 = vmatpush.msra.mxu0 %v1077
    %1103 = vmatpush.msra.mxu0 %v1076
    %1104 = vmatpush.msra.mxu0 %v1075
    %1105 = vmatpush.msra.mxu0 %v1074
    %1106 = vmatpush.msra.mxu0 %v1073
    %1107 = vmatpush.msra.mxu0 %v1072
    %1108 = vmatmul.f32.gmra.mxu0 %v1040
    %v1109 = vpop.f32.mrf.mxu0
    %v1110 = vadd.f32 %v1090, %v1109
    %1111 = vmatmul.f32.gmra.mxu0 %v1041
    %v1112 = vpop.f32.mrf.mxu0
    %v1113 = vadd.f32 %v1090, %v1112
    %1114 = vmatmul.f32.gmra.mxu0 %v1042
    %v1115 = vpop.f32.mrf.mxu0
    %v1116 = vadd.f32 %v1090, %v1115
    %1117 = vmatmul.f32.gmra.mxu0 %v1043
    %v1118 = vpop.f32.mrf.mxu0
    %v1119 = vadd.f32 %v1090, %v1118
    %1120 = vmatmul.f32.gmra.mxu0 %v1044
    %v1121 = vpop.f32.mrf.mxu0
    %v1122 = vadd.f32 %v1090, %v1121
    %1123 = vmatmul.f32.gmra.mxu0 %v1045
    %v1124 = vpop.f32.mrf.mxu0
    %v1125 = vadd.f32 %v1090, %v1124
    %1126 = vmatmul.f32.gmra.mxu0 %v1046
    %v1127 = vpop.f32.mrf.mxu0
    %v1128 = vadd.f32 %v1090, %v1127
    %1129 = vmatmul.f32.gmra.mxu0 %v1047
    %v1130 = vpop.f32.mrf.mxu0
    %v1131 = vadd.f32 %v1090, %v1130
    %1132 = vmatmul.f32.gmra.mxu0 %v1048
    %v1133 = vpop.f32.mrf.mxu0
    %v1134 = vadd.f32 %v1090, %v1133
    %1135 = vmatmul.f32.gmra.mxu0 %v1049
    %v1136 = vpop.f32.mrf.mxu0
    %v1137 = vadd.f32 %v1090, %v1136
    %1138 = vmatmul.f32.gmra.mxu0 %v1050
    %v1139 = vpop.f32.mrf.mxu0
    %v1140 = vadd.f32 %v1090, %v1139
    %1141 = vmatmul.f32.gmra.mxu0 %v1051
    %v1142 = vpop.f32.mrf.mxu0
    %v1143 = vadd.f32 %v1090, %v1142
    %1144 = vmatmul.f32.gmra.mxu0 %v1052
    %v1145 = vpop.f32.mrf.mxu0
    %v1146 = vadd.f32 %v1090, %v1145
    %1147 = vmatmul.f32.gmra.mxu0 %v1053
    %v1148 = vpop.f32.mrf.mxu0
    %v1149 = vadd.f32 %v1090, %v1148
    %1150 = vmatmul.f32.gmra.mxu0 %v1054
    %v1151 = vpop.f32.mrf.mxu0
    %v1152 = vadd.f32 %v1090, %v1151
    %1153 = vmatmul.f32.gmra.mxu0 %v1055
    %v1154 = vpop.f32.mrf.mxu0
    %v1155 = vadd.f32 %v1090, %v1154
    %1156 = vmatmul.f32.gmra.mxu0 %v1056
    %v1157 = vpop.f32.mrf.mxu0
    %v1158 = vadd.f32 %v1090, %v1157
    %1159 = vmatmul.f32.gmra.mxu0 %v1057
    %v1160 = vpop.f32.mrf.mxu0
    %v1161 = vadd.f32 %v1090, %v1160
    %1162 = vmatmul.f32.gmra.mxu0 %v1058
    %v1163 = vpop.f32.mrf.mxu0
    %v1164 = vadd.f32 %v1090, %v1163
    %1165 = vmatmul.f32.gmra.mxu0 %v1059
    %v1166 = vpop.f32.mrf.mxu0
    %v1167 = vadd.f32 %v1090, %v1166
    %1168 = vmatmul.f32.gmra.mxu0 %v1060
    %v1169 = vpop.f32.mrf.mxu0
    %v1170 = vadd.f32 %v1090, %v1169
    %1171 = vmatmul.f32.gmra.mxu0 %v1061
    %v1172 = vpop.f32.mrf.mxu0
    %v1173 = vadd.f32 %v1090, %v1172
    %1174 = vmatmul.f32.gmra.mxu0 %v1062
    %v1175 = vpop.f32.mrf.mxu0
    %v1176 = vadd.f32 %v1090, %v1175
    %1177 = vmatmul.f32.gmra.mxu0 %v1063
    %v1178 = vpop.f32.mrf.mxu0
    %v1179 = vadd.f32 %v1090, %v1178
    %1180 = vmatmul.f32.gmra.mxu0 %v1064
    %v1181 = vpop.f32.mrf.mxu0
    %v1182 = vadd.f32 %v1090, %v1181
    %1183 = vmatmul.f32.gmra.mxu0 %v1065
    %v1184 = vpop.f32.mrf.mxu0
    %v1185 = vadd.f32 %v1090, %v1184
    %1186 = vmatmul.f32.gmra.mxu0 %v1066
    %v1187 = vpop.f32.mrf.mxu0
    %v1188 = vadd.f32 %v1090, %v1187
    %1189 = vmatmul.f32.gmra.mxu0 %v1067
    %v1190 = vpop.f32.mrf.mxu0
    %v1191 = vadd.f32 %v1090, %v1190
    %1192 = vmatmul.f32.gmra.mxu0 %v1068
    %v1193 = vpop.f32.mrf.mxu0
    %v1194 = vadd.f32 %v1090, %v1193
    %1195 = vmatmul.f32.gmra.mxu0 %v1069
    %v1196 = vpop.f32.mrf.mxu0
    %v1197 = vadd.f32 %v1090, %v1196
    %1198 = vmatmul.f32.gmra.mxu0 %v1070
    %v1199 = vpop.f32.mrf.mxu0
    %v1200 = vadd.f32 %v1090, %v1199
    %1201 = vmatmul.f32.gmra.mxu0 %v1071
    %v1202 = vpop.f32.mrf.mxu0
    %v1203 = vadd.f32 %v1090, %v1202
    %1204 = vdwg.mxu0
    %v1205 = vtanh.pop %v1110
    %v1206 = vtanh.pop %v1113
    %v1207 = vtanh.pop %v1116
    %v1208 = vtanh.pop %v1119
    %v1209 = vtanh.pop %v1122
    %v1210 = vtanh.pop %v1125
    %v1211 = vtanh.pop %v1128
    %v1212 = vtanh.pop %v1131
    %v1213 = vtanh.pop %v1134
    %v1214 = vtanh.pop %v1137
    %v1215 = vtanh.pop %v1140
    %v1216 = vtanh.pop %v1143
    %v1217 = vtanh.pop %v1146
    %v1218 = vtanh.pop %v1149
    %v1219 = vtanh.pop %v1152
    %v1220 = vtanh.pop %v1155
    %v1221 = vtanh.pop %v1158
    %v1222 = vtanh.pop %v1161
    %v1223 = vtanh.pop %v1164
    %v1224 = vtanh.pop %v1167
    %v1225 = vtanh.pop %v1170
    %v1226 = vtanh.pop %v1173
    %v1227 = vtanh.pop %v1176
    %v1228 = vtanh.pop %v1179
    %v1229 = vtanh.pop %v1182
    %v1230 = vtanh.pop %v1185
    %v1231 = vtanh.pop %v1188
    %v1232 = vtanh.pop %v1191
    %v1233 = vtanh.pop %v1194
    %v1234 = vtanh.pop %v1197
    %v1235 = vtanh.pop %v1200
    %v1236 = vtanh.pop %v1203
    %1269 = vrot.lane.b32.xlu0 %v311, 64
    %v1270 = vpop.permute.xlu0 %1269
    %1271 = vrot.lane.b32.xlu0 %v314, 64
    %v1272 = vpop.permute.xlu0 %1271
    %1273 = vrot.lane.b32.xlu0 %v317, 64
    %v1274 = vpop.permute.xlu0 %1273
    %1275 = vrot.lane.b32.xlu0 %v320, 64
    %v1276 = vpop.permute.xlu0 %1275
    %1277 = vrot.lane.b32.xlu0 %v323, 64
    %v1278 = vpop.permute.xlu0 %1277
    %1279 = vrot.lane.b32.xlu0 %v326, 64
    %v1280 = vpop.permute.xlu0 %1279
    %1281 = vrot.lane.b32.xlu0 %v329, 64
    %v1282 = vpop.permute.xlu0 %1281
    %1283 = vrot.lane.b32.xlu0 %v332, 64
    %v1284 = vpop.permute.xlu0 %1283
    %1285 = vrot.lane.b32.xlu0 %v335, 64
    %v1286 = vpop.permute.xlu0 %1285
    %1287 = vrot.lane.b32.xlu0 %v338, 64
    %v1288 = vpop.permute.xlu0 %1287
    %1289 = vrot.lane.b32.xlu0 %v341, 64
    %v1290 = vpop.permute.xlu0 %1289
    %1291 = vrot.lane.b32.xlu0 %v344, 64
    %v1292 = vpop.permute.xlu0 %1291
    %1293 = vrot.lane.b32.xlu0 %v347, 64
    %v1294 = vpop.permute.xlu0 %1293
    %1295 = vrot.lane.b32.xlu0 %v350, 64
    %v1296 = vpop.permute.xlu0 %1295
    %1297 = vrot.lane.b32.xlu0 %v353, 64
    %v1298 = vpop.permute.xlu0 %1297
    %1299 = vrot.lane.b32.xlu0 %v356, 64
    %v1300 = vpop.permute.xlu0 %1299
    %1301 = vrot.lane.b32.xlu0 %v359, 64
    %v1302 = vpop.permute.xlu0 %1301
    %1303 = vrot.lane.b32.xlu0 %v362, 64
    %v1304 = vpop.permute.xlu0 %1303
    %1305 = vrot.lane.b32.xlu0 %v365, 64
    %v1306 = vpop.permute.xlu0 %1305
    %1307 = vrot.lane.b32.xlu0 %v368, 64
    %v1308 = vpop.permute.xlu0 %1307
    %1309 = vrot.lane.b32.xlu0 %v371, 64
    %v1310 = vpop.permute.xlu0 %1309
    %1311 = vrot.lane.b32.xlu0 %v374, 64
    %v1312 = vpop.permute.xlu0 %1311
    %1313 = vrot.lane.b32.xlu0 %v377, 64
    %v1314 = vpop.permute.xlu0 %1313
    %1315 = vrot.lane.b32.xlu0 %v380, 64
    %v1316 = vpop.permute.xlu0 %1315
    %1317 = vrot.lane.b32.xlu0 %v383, 64
    %v1318 = vpop.permute.xlu0 %1317
    %1319 = vrot.lane.b32.xlu0 %v386, 64
    %v1320 = vpop.permute.xlu0 %1319
    %1321 = vrot.lane.b32.xlu0 %v389, 64
    %v1322 = vpop.permute.xlu0 %1321
    %1323 = vrot.lane.b32.xlu0 %v392, 64
    %v1324 = vpop.permute.xlu0 %1323
    %1325 = vrot.lane.b32.xlu0 %v395, 64
    %v1326 = vpop.permute.xlu0 %1325
    %1327 = vrot.lane.b32.xlu0 %v398, 64
    %v1328 = vpop.permute.xlu0 %1327
    %1329 = vrot.lane.b32.xlu0 %v401, 64
    %v1330 = vpop.permute.xlu0 %1329
    %1331 = vrot.lane.b32.xlu0 %v404, 64
    %v1332 = vpop.permute.xlu0 %1331
    %vm1365 = vcmask 523264
    %v1366 = vsel %vm1365, %v1205, %v1270
    %v1367 = vsel %vm1365, %v1206, %v1272
    %v1368 = vsel %vm1365, %v1207, %v1274
    %v1369 = vsel %vm1365, %v1208, %v1276
    %v1370 = vsel %vm1365, %v1209, %v1278
    %v1371 = vsel %vm1365, %v1210, %v1280
    %v1372 = vsel %vm1365, %v1211, %v1282
    %v1373 = vsel %vm1365, %v1212, %v1284
    %v1374 = vsel %vm1365, %v1213, %v1286
    %v1375 = vsel %vm1365, %v1214, %v1288
    %v1376 = vsel %vm1365, %v1215, %v1290
    %v1377 = vsel %vm1365, %v1216, %v1292
    %v1378 = vsel %vm1365, %v1217, %v1294
    %v1379 = vsel %vm1365, %v1218, %v1296
    %v1380 = vsel %vm1365, %v1219, %v1298
    %v1381 = vsel %vm1365, %v1220, %v1300
    %v1382 = vsel %vm1365, %v1221, %v1302
    %v1383 = vsel %vm1365, %v1222, %v1304
    %v1384 = vsel %vm1365, %v1223, %v1306
    %v1385 = vsel %vm1365, %v1224, %v1308
    %v1386 = vsel %vm1365, %v1225, %v1310
    %v1387 = vsel %vm1365, %v1226, %v1312
    %v1388 = vsel %vm1365, %v1227, %v1314
    %v1389 = vsel %vm1365, %v1228, %v1316
    %v1390 = vsel %vm1365, %v1229, %v1318
    %v1391 = vsel %vm1365, %v1230, %v1320
    %v1392 = vsel %vm1365, %v1231, %v1322
    %v1393 = vsel %vm1365, %v1232, %v1324
    %v1394 = vsel %vm1365, %v1233, %v1326
    %v1395 = vsel %vm1365, %v1234, %v1328
    %v1396 = vsel %vm1365, %v1235, %v1330
    %v1397 = vsel %vm1365, %v1236, %v1332
    %1398 = vst [vmem:[#allocation8] sm:$0xff] %v1366
    %1399 = vst [vmem:[#allocation8 + $0x8] sm:$0xff] %v1367
    %1400 = vst [vmem:[#allocation8 + $0x10] sm:$0xff] %v1368
    %1401 = vst [vmem:[#allocation8 + $0x18] sm:$0xff] %v1369
    %1402 = vst [vmem:[#allocation8 + $0x20] sm:$0xff] %v1370
    %1403 = vst [vmem:[#allocation8 + $0x28] sm:$0xff] %v1371
    %1404 = vst [vmem:[#allocation8 + $0x30] sm:$0xff] %v1372
    %1405 = vst [vmem:[#allocation8 + $0x38] sm:$0xff] %v1373
    %1406 = vst [vmem:[#allocation8 + $0x40] sm:$0xff] %v1374
    %1407 = vst [vmem:[#allocation8 + $0x48] sm:$0xff] %v1375
    %1408 = vst [vmem:[#allocation8 + $0x50] sm:$0xff] %v1376
    %1409 = vst [vmem:[#allocation8 + $0x58] sm:$0xff] %v1377
    %1410 = vst [vmem:[#allocation8 + $0x60] sm:$0xff] %v1378
    %1411 = vst [vmem:[#allocation8 + $0x68] sm:$0xff] %v1379
    %1412 = vst [vmem:[#allocation8 + $0x70] sm:$0xff] %v1380
    %1413 = vst [vmem:[#allocation8 + $0x78] sm:$0xff] %v1381
    %1414 = vst [vmem:[#allocation8 + $0x80] sm:$0xff] %v1382
    %1415 = vst [vmem:[#allocation8 + $0x88] sm:$0xff] %v1383
    %1416 = vst [vmem:[#allocation8 + $0x90] sm:$0xff] %v1384
    %1417 = vst [vmem:[#allocation8 + $0x98] sm:$0xff] %v1385
    %1418 = vst [vmem:[#allocation8 + $0xa0] sm:$0xff] %v1386
    %1419 = vst [vmem:[#allocation8 + $0xa8] sm:$0xff] %v1387
    %1420 = vst [vmem:[#allocation8 + $0xb0] sm:$0xff] %v1388
    %1421 = vst [vmem:[#allocation8 + $0xb8] sm:$0xff] %v1389
    %1422 = vst [vmem:[#allocation8 + $0xc0] sm:$0xff] %v1390
    %1423 = vst [vmem:[#allocation8 + $0xc8] sm:$0xff] %v1391
    %1424 = vst [vmem:[#allocation8 + $0xd0] sm:$0xff] %v1392
    %1425 = vst [vmem:[#allocation8 + $0xd8] sm:$0xff] %v1393
    %1426 = vst [vmem:[#allocation8 + $0xe0] sm:$0xff] %v1394
    %1427 = vst [vmem:[#allocation8 + $0xe8] sm:$0xff] %v1395
    %1428 = vst [vmem:[#allocation8 + $0xf0] sm:$0xff] %v1396
    %1429 = vst [vmem:[#allocation8 + $0xf8] sm:$0xff] %v1397
    // Predicated region
    $region50: #{tpu_custom_call.1} parent=1 // pred_check
      _
    $region51: #{tpu_custom_call.1} parent=1 // pred_check_branch
      %1431 = sbr.rel (0) target = $region53
    $region52: #{tpu_custom_call.1} parent=1 // pred_region
      %1433 = vsyncadd [#allocation4], 0
      %s1434 = sshll.u32 [#allocation8], 4
      %s1435 = int_to_ptr.vmem [resolvable:$true] %s1434
      %s1436 = sshll.u32 %s9, 4
      %s1437 = int_to_ptr.hbm [resolvable:$true] %s1436
      %1442 = dma.vmem_to_hbm [thread:$0]  %s1435, 4096, %s1437, [#allocation4], 128, 128, 8
    $region53: #{tpu_custom_call.1} parent=1 // pred_fallthru
      _
    // Predicated region
    $region54: #{tpu_custom_call.1} parent=1 // pred_check
      _
    $region55: #{tpu_custom_call.1} parent=1 // pred_check_branch
      %1444 = sbr.rel (0) target = $region57
    $region56: #{tpu_custom_call.1} parent=1 // pred_region
      %1446 = dma.done [#allocation4], 4096
    $region57: #{tpu_custom_call.1} parent=1 // pred_fallthru
      _
    %1447 = vsyncpa [#allocation3], 1
    %1448 = vsyncpa [#allocation6], 1
    %1449 = vsyncpa [#allocation4], 1

</llo_original>
